<compile_context>
chip_gen: v5e
topology: v5e:2x2
jax: 0.10.0
libtpu: 0.0.40
codegen_flags: <defaults>
</compile_context>

<pallas_src>
import functools

import jax
import jax.numpy as jnp
from jax import lax
from jax.experimental import pallas as pl
from jax.experimental.pallas import tpu as pltpu


def _round_up(n, m):
    return ((n + m - 1) // m) * m


def _cdiv(a, b):
    return -(-a // b)


# ---------------------------------------------------------------------------
# Kernel
# ---------------------------------------------------------------------------
def mlp_kernel(x_ref, w1_ref, b1_ref, w2_ref, b2_ref, w3_ref, b3_ref,
               w4_ref, b4_ref, o_ref, *, compute_dtype):
    """Fused 4-layer MLP.

    x_ref:  [batch_tile, in_features]          (natural nn.Linear input layout)
    wN_ref: [out_features, in_features]        (PyTorch nn.Linear layout, bf16)
    bN_ref: [out_features, 1]                  (f32, broadcast along lanes)
    o_ref:  [out_features_padded, batch_tile]  (feature-major, lane-dense)

    Dropout layers are identity in eval mode -> omitted.
    """
    x = x_ref[...].astype(compute_dtype)                       # [bt, in_f]

    # Layer 1: contract over in_features for BOTH operands -> result is
    # [h1, bt], i.e. already the feature-major / lane-dense layout everything
    # downstream (and the output store) uses.  No wrapper transpose needed.
    h = lax.dot_general(w1_ref[...], x,
                        dimension_numbers=(((1,), (1,)), ((), ())),
                        preferred_element_type=jnp.float32)
    h = jnp.maximum(h + b1_ref[...], 0.0)                      # bias bcast on lanes

    h = jnp.dot(w2_ref[...], h.astype(compute_dtype),
                preferred_element_type=jnp.float32)
    h = jnp.maximum(h + b2_ref[...], 0.0)

    h = jnp.dot(w3_ref[...], h.astype(compute_dtype),
                preferred_element_type=jnp.float32)
    h = jnp.maximum(h + b3_ref[...], 0.0)

    out = jnp.dot(w4_ref[...], h.astype(compute_dtype),
                  preferred_element_type=jnp.float32)
    o_ref[...] = (out + b4_ref[...]).astype(o_ref.dtype)


# ---------------------------------------------------------------------------
# Generation-aware grid selection
# ---------------------------------------------------------------------------
def _cores_and_semantics():
    """(# TensorCores sharing the grid, dimension semantics for the batch axis)."""
    try:
        kind = jax.devices()[0].device_kind.lower()
    except Exception:  # pragma: no cover - defensive
        kind = ""
    if "7" in kind and hasattr(pltpu, "CORE_PARALLEL"):
        # v7x: 2 TensorCores per chip; CORE_PARALLEL actually splits the grid.
        return 2, pltpu.CORE_PARALLEL
    if ("v4" in kind) or ("v5p" in kind):
        # Megacore parts: "parallel" shards grid axes across the fused TCs.
        return 2, "parallel"
    return 1, "parallel"


def _pick_grid(B, batch_tile=None):
    """Pick (batch_tile, n_tiles, dimension_semantics) for batch size B."""
    num_tc, sem = _cores_and_semantics()
    B128 = _round_up(max(B, 1), 128)
    if batch_tile is not None:
        bt = max(128, (int(batch_tile) // 128) * 128)
    else:
        # One tile per TensorCore when it fits; cap at 4096 lanes (256 KB f32
        # per x tile -> VMEM-trivial, and >=128 KB DMAs keep HBM BW efficient).
        bt = _round_up(_cdiv(B128, max(num_tc, 1)), 128)
        bt = min(max(bt, 128), 4096)
    n_tiles = _cdiv(B128, bt)
    if num_tc >= 2 and n_tiles % num_tc != 0:
        n_tiles = _round_up(n_tiles, num_tc)   # balanced work for both cores
    return bt, n_tiles, sem


# ---------------------------------------------------------------------------
# One-time parameter preparation (hoisted out of the per-call forward)
# ---------------------------------------------------------------------------
def prepare_params(params, compute_dtype=jnp.bfloat16):
    """Cast weights to bf16 (native MXU operands) and pad fc4 rows to a
    sublane multiple once, instead of per forward call."""
    w1, b1, w2, b2, w3, b3, w4, b4 = params
    out_f = w4.shape[0]
    out_f_pad = _round_up(out_f, 8)

    w4c = w4.astype(compute_dtype)
    b4p = b4.astype(jnp.float32)
    if out_f_pad != out_f:
        w4c = jnp.pad(w4c, ((0, out_f_pad - out_f), (0, 0)))
        b4p = jnp.pad(b4p, ((0, out_f_pad - out_f), (0, 0)))

    tensors = (w1.astype(compute_dtype), b1.astype(jnp.float32),
               w2.astype(compute_dtype), b2.astype(jnp.float32),
               w3.astype(compute_dtype), b3.astype(jnp.float32),
               w4c, b4p)
    return {"tensors": tensors,
            "out_features": out_f,
            "compute_dtype": compute_dtype}


# ---------------------------------------------------------------------------
# Forward wrapper
# ---------------------------------------------------------------------------
def neural_net_forward(x, prepared, *, batch_tile=None):
    """x: [B, input_size] -> [B, output_size]. `prepared` from prepare_params()."""
    w1c, b1, w2c, b2, w3c, b3, w4c, b4p = prepared["tensors"]
    out_f = prepared["out_features"]
    compute_dtype = prepared["compute_dtype"]

    B, in_f = x.shape
    bt, n_tiles, sem = _pick_grid(B, batch_tile)
    B_pad = bt * n_tiles
    if B_pad != B:                       # only pad when actually needed
        x = jnp.pad(x, ((0, B_pad - B), (0, 0)))
    out_f_pad = w4c.shape[0]

    full = lambda a: pl.BlockSpec(a.shape, lambda i: (0, 0))   # VMEM-resident

    out_t = pl.pallas_call(
        functools.partial(mlp_kernel, compute_dtype=compute_dtype),
        out_shape=jax.ShapeDtypeStruct((out_f_pad, B_pad), x.dtype),
        grid_spec=pltpu.PrefetchScalarGridSpec(
            num_scalar_prefetch=0,
            grid=(n_tiles,),
            in_specs=[
                pl.BlockSpec((bt, in_f), lambda i: (i, 0)),    # natural layout x
                full(w1c), full(b1),
                full(w2c), full(b2),
                full(w3c), full(b3),
                full(w4c), full(b4p),
            ],
            out_specs=pl.BlockSpec((out_f_pad, bt), lambda i: (0, i)),
        ),
        compiler_params=pltpu.CompilerParams(
            dimension_semantics=(sem,),   # batch tiles -> cores (v7x/megacore)
        ),
    )(x, w1c, b1, w2c, b2, w3c, b3, w4c, b4p)

    # strip feature/batch padding, back to the module's [B, out_f] layout
    # (consumers that accept feature-major output could skip this transpose)
    return out_t[:out_f, :B].T


# ---------------------------------------------------------------------------
# Synthetic init + references
# ---------------------------------------------------------------------------
def init_params(key, input_size, h1, h2, h3, output_size, dtype=jnp.float32):
    """Deterministic synthetic init, PyTorch-Linear-like uniform bounds.
    Weights in nn.Linear layout [out_features, in_features]; biases [out, 1]."""
    sizes = [(input_size, h1), (h1, h2), (h2, h3), (h3, output_size)]
    params = []
    for fan_in, fan_out in sizes:
        key, kw, kb = jax.random.split(key, 3)
        bound = 1.0 / (fan_in ** 0.5)
        w = jax.random.uniform(kw, (fan_out, fan_in), dtype, -bound, bound)
        b = jax.random.uniform(kb, (fan_out, 1), dtype, -bound, bound)
        params += [w, b]
    return tuple(params)


def reference_forward_matched(x, params, compute_dtype=jnp.bfloat16):
    """Pure-JAX reference using the same bf16-operand / f32-accumulate recipe."""
    w1, b1, w2, b2, w3, b3, w4, b4 = params

    def layer(h, w, b, relu):
        y = jnp.dot(h.astype(compute_dtype), w.T.astype(compute_dtype),
                    preferred_element_type=jnp.float32) + b.T
        return jnp.maximum(y, 0.0) if relu else y

    h = layer(x, w1, b1, True)
    h = layer(h, w2, b2, True)
    h = layer(h, w3, b3, True)
    return layer(h, w4, b4, False)


def reference_forward_f32(x, params):
    """Full-precision f32 reference (semantics check, looser tolerance)."""
    w1, b1, w2, b2, w3, b3, w4, b4 = params
    hp = jax.lax.Precision.HIGHEST
    h = jnp.maximum(jnp.dot(x, w1.T, precision=hp) + b1.T, 0.0)
    h = jnp.maximum(jnp.dot(h, w2.T, precision=hp) + b2.T, 0.0)
    h = jnp.maximum(jnp.dot(h, w3.T, precision=hp) + b3.T, 0.0)
    return jnp.dot(h, w4.T, precision=hp) + b4.T


if __name__ == "__main__":
    # Shapes consistent with the module's __init__ signature.
    input_size, h1, h2, h3, output_size = 16, 64, 32, 32, 4
    batch = 256                       # 128-multiple -> zero-pad fast path

    key = jax.random.PRNGKey(0)
    key, kx = jax.random.split(key)
    x = jax.random.normal(kx, (batch, input_size), jnp.float32)
    params = init_params(key, input_size, h1, h2, h3, output_size)

    prepared = prepare_params(params)     # one-time cast/pad, outside forward

    fwd = jax.jit(lambda xb: neural_net_forward(xb, prepared))
    out = jax.block_until_ready(fwd(x))
    assert out.shape == (batch, output_size)

    ref_bf16 = reference_forward_matched(x, params)
    ref_f32 = reference_forward_f32(x, params)
    assert jnp.allclose(out, ref_bf16, atol=1e-2, rtol=1e-2)
    assert jnp.allclose(out, ref_f32, atol=5e-2, rtol=5e-2)

    # ragged batch -> exercises the pad-only-when-needed path
    x2 = x[:37]
    out2 = jax.block_until_ready(neural_net_forward(x2, prepared))
    assert out2.shape == (37, output_size)
    assert jnp.allclose(out2, reference_forward_matched(x2, params),
                        atol=1e-2, rtol=1e-2)

    print("KERNEL_OK")
</pallas_src>

<mosaic_0001>
module attributes {stable_mosaic.version = 11 : i64} {
  func.func @mlp_kernel(%arg0: i32, %arg1: memref<256x16xf32, #tpu.memory_space<vmem>>, %arg2: memref<64x16xbf16, #tpu.memory_space<vmem>>, %arg3: memref<64x1xf32, #tpu.memory_space<vmem>>, %arg4: memref<32x64xbf16, #tpu.memory_space<vmem>>, %arg5: memref<32x1xf32, #tpu.memory_space<vmem>>, %arg6: memref<32x32xbf16, #tpu.memory_space<vmem>>, %arg7: memref<32x1xf32, #tpu.memory_space<vmem>>, %arg8: memref<8x32xbf16, #tpu.memory_space<vmem>>, %arg9: memref<8x1xf32, #tpu.memory_space<vmem>>, %arg10: memref<8x256xf32, #tpu.memory_space<vmem>>) attributes {dimension_semantics = [#tpu.dimension_semantics<parallel>], iteration_bounds = array<i64: 1>, scalar_prefetch = 0 : i64, scratch_operands = 0 : i64, tpu.core_type = #tpu.core_type<tc>, window_params = [{transform_indices = @transform_0, window_bounds = array<i64: 256, 16>}, {pipeline_mode = #tpu.pipeline_mode<synchronous>, transform_indices = @transform_1, window_bounds = array<i64: 64, 16>}, {pipeline_mode = #tpu.pipeline_mode<synchronous>, transform_indices = @transform_2, window_bounds = array<i64: 64, 1>}, {pipeline_mode = #tpu.pipeline_mode<synchronous>, transform_indices = @transform_3, window_bounds = array<i64: 32, 64>}, {pipeline_mode = #tpu.pipeline_mode<synchronous>, transform_indices = @transform_4, window_bounds = array<i64: 32, 1>}, {pipeline_mode = #tpu.pipeline_mode<synchronous>, transform_indices = @transform_5, window_bounds = array<i64: 32, 32>}, {pipeline_mode = #tpu.pipeline_mode<synchronous>, transform_indices = @transform_6, window_bounds = array<i64: 32, 1>}, {pipeline_mode = #tpu.pipeline_mode<synchronous>, transform_indices = @transform_7, window_bounds = array<i64: 8, 32>}, {pipeline_mode = #tpu.pipeline_mode<synchronous>, transform_indices = @transform_8, window_bounds = array<i64: 8, 1>}, {transform_indices = @transform_9, window_bounds = array<i64: 8, 256>}]} {
    %c0 = arith.constant 0 : index
    %c0_0 = arith.constant 0 : index
    %0 = vector.load %arg1[%c0, %c0_0] : memref<256x16xf32, #tpu.memory_space<vmem>>, vector<256x16xf32>
    %1 = arith.truncf %0 : vector<256x16xf32> to vector<256x16xbf16>
    %c0_1 = arith.constant 0 : index
    %c0_2 = arith.constant 0 : index
    %2 = vector.load %arg2[%c0_1, %c0_2] : memref<64x16xbf16, #tpu.memory_space<vmem>>, vector<64x16xbf16>
    %cst = arith.constant dense<0.000000e+00> : vector<64x256xf32>
    %3 = tpu.matmul %2, %1, %cst {dimension_numbers = #tpu.dot_dimension_numbers<[1], [1], [0], [0], [0, 0, 1, 0], [], []>} : vector<64x16xbf16>, vector<256x16xbf16>, vector<64x256xf32> -> vector<64x256xf32>
    %c0_3 = arith.constant 0 : index
    %c0_4 = arith.constant 0 : index
    %4 = vector.load %arg3[%c0_3, %c0_4] : memref<64x1xf32, #tpu.memory_space<vmem>>, vector<64x1xf32>
    %5 = vector.broadcast %4 : vector<64x1xf32> to vector<64x256xf32>
    %6 = arith.addf %3, %5 : vector<64x256xf32>
    %cst_5 = arith.constant 0.000000e+00 : f32
    %7 = vector.broadcast %cst_5 : f32 to vector<64x256xf32>
    %8 = arith.maximumf %6, %7 : vector<64x256xf32>
    %c0_6 = arith.constant 0 : index
    %c0_7 = arith.constant 0 : index
    %9 = vector.load %arg4[%c0_6, %c0_7] : memref<32x64xbf16, #tpu.memory_space<vmem>>, vector<32x64xbf16>
    %10 = arith.truncf %8 : vector<64x256xf32> to vector<64x256xbf16>
    %cst_8 = arith.constant dense<0.000000e+00> : vector<32x256xf32>
    %11 = tpu.matmul %9, %10, %cst_8 {dimension_numbers = #tpu.dot_dimension_numbers<[1], [0], [0], [1], [0, 0, 1, 1], [], []>} : vector<32x64xbf16>, vector<64x256xbf16>, vector<32x256xf32> -> vector<32x256xf32>
    %c0_9 = arith.constant 0 : index
    %c0_10 = arith.constant 0 : index
    %12 = vector.load %arg5[%c0_9, %c0_10] : memref<32x1xf32, #tpu.memory_space<vmem>>, vector<32x1xf32>
    %13 = vector.broadcast %12 : vector<32x1xf32> to vector<32x256xf32>
    %14 = arith.addf %11, %13 : vector<32x256xf32>
    %cst_11 = arith.constant 0.000000e+00 : f32
    %15 = vector.broadcast %cst_11 : f32 to vector<32x256xf32>
    %16 = arith.maximumf %14, %15 : vector<32x256xf32>
    %c0_12 = arith.constant 0 : index
    %c0_13 = arith.constant 0 : index
    %17 = vector.load %arg6[%c0_12, %c0_13] : memref<32x32xbf16, #tpu.memory_space<vmem>>, vector<32x32xbf16>
    %18 = arith.truncf %16 : vector<32x256xf32> to vector<32x256xbf16>
    %cst_14 = arith.constant dense<0.000000e+00> : vector<32x256xf32>
    %19 = tpu.matmul %17, %18, %cst_14 {dimension_numbers = #tpu.dot_dimension_numbers<[1], [0], [0], [1], [0, 0, 1, 1], [], []>} : vector<32x32xbf16>, vector<32x256xbf16>, vector<32x256xf32> -> vector<32x256xf32>
    %c0_15 = arith.constant 0 : index
    %c0_16 = arith.constant 0 : index
    %20 = vector.load %arg7[%c0_15, %c0_16] : memref<32x1xf32, #tpu.memory_space<vmem>>, vector<32x1xf32>
    %21 = vector.broadcast %20 : vector<32x1xf32> to vector<32x256xf32>
    %22 = arith.addf %19, %21 : vector<32x256xf32>
    %cst_17 = arith.constant 0.000000e+00 : f32
    %23 = vector.broadcast %cst_17 : f32 to vector<32x256xf32>
    %24 = arith.maximumf %22, %23 : vector<32x256xf32>
    %c0_18 = arith.constant 0 : index
    %c0_19 = arith.constant 0 : index
    %25 = vector.load %arg8[%c0_18, %c0_19] : memref<8x32xbf16, #tpu.memory_space<vmem>>, vector<8x32xbf16>
    %26 = arith.truncf %24 : vector<32x256xf32> to vector<32x256xbf16>
    %cst_20 = arith.constant dense<0.000000e+00> : vector<8x256xf32>
    %27 = tpu.matmul %25, %26, %cst_20 {dimension_numbers = #tpu.dot_dimension_numbers<[1], [0], [0], [1], [0, 0, 1, 1], [], []>} : vector<8x32xbf16>, vector<32x256xbf16>, vector<8x256xf32> -> vector<8x256xf32>
    %c0_21 = arith.constant 0 : index
    %c0_22 = arith.constant 0 : index
    %28 = vector.load %arg9[%c0_21, %c0_22] : memref<8x1xf32, #tpu.memory_space<vmem>>, vector<8x1xf32>
    %29 = vector.broadcast %28 : vector<8x1xf32> to vector<8x256xf32>
    %30 = arith.addf %27, %29 : vector<8x256xf32>
    %c0_23 = arith.constant 0 : index
    %c0_24 = arith.constant 0 : index
    %31 = vector.load %arg10[%c0_23, %c0_24] : memref<8x256xf32, #tpu.memory_space<vmem>>, vector<8x256xf32>
    tpu.vector_store %arg10[%c0_23, %c0_24], %30 {strides = array<i32>} : memref<8x256xf32, #tpu.memory_space<vmem>>, vector<8x256xf32>,
    return
  }
  func.func @transform_0(%arg0: i32) -> (i32, i32) {
    %c0_i32 = arith.constant 0 : i32
    %c0_i32_0 = arith.constant 0 : i32
    return %arg0, %c0_i32 : i32, i32
  }
  func.func @transform_1(%arg0: i32) -> (i32, i32) {
    %c0_i32 = arith.constant 0 : i32
    %c0_i32_0 = arith.constant 0 : i32
    %c0_i32_1 = arith.constant 0 : i32
    return %c0_i32, %c0_i32_0 : i32, i32
  }
  func.func @transform_2(%arg0: i32) -> (i32, i32) {
    %c0_i32 = arith.constant 0 : i32
    %c0_i32_0 = arith.constant 0 : i32
    %c0_i32_1 = arith.constant 0 : i32
    return %c0_i32, %c0_i32_0 : i32, i32
  }
  func.func @transform_3(%arg0: i32) -> (i32, i32) {
    %c0_i32 = arith.constant 0 : i32
    %c0_i32_0 = arith.constant 0 : i32
    %c0_i32_1 = arith.constant 0 : i32
    return %c0_i32, %c0_i32_0 : i32, i32
  }
  func.func @transform_4(%arg0: i32) -> (i32, i32) {
    %c0_i32 = arith.constant 0 : i32
    %c0_i32_0 = arith.constant 0 : i32
    %c0_i32_1 = arith.constant 0 : i32
    return %c0_i32, %c0_i32_0 : i32, i32
  }
  func.func @transform_5(%arg0: i32) -> (i32, i32) {
    %c0_i32 = arith.constant 0 : i32
    %c0_i32_0 = arith.constant 0 : i32
    %c0_i32_1 = arith.constant 0 : i32
    return %c0_i32, %c0_i32_0 : i32, i32
  }
  func.func @transform_6(%arg0: i32) -> (i32, i32) {
    %c0_i32 = arith.constant 0 : i32
    %c0_i32_0 = arith.constant 0 : i32
    %c0_i32_1 = arith.constant 0 : i32
    return %c0_i32, %c0_i32_0 : i32, i32
  }
  func.func @transform_7(%arg0: i32) -> (i32, i32) {
    %c0_i32 = arith.constant 0 : i32
    %c0_i32_0 = arith.constant 0 : i32
    %c0_i32_1 = arith.constant 0 : i32
    return %c0_i32, %c0_i32_0 : i32, i32
  }
  func.func @transform_8(%arg0: i32) -> (i32, i32) {
    %c0_i32 = arith.constant 0 : i32
    %c0_i32_0 = arith.constant 0 : i32
    %c0_i32_1 = arith.constant 0 : i32
    return %c0_i32, %c0_i32_0 : i32, i32
  }
  func.func @transform_9(%arg0: i32) -> (i32, i32) {
    %c0_i32 = arith.constant 0 : i32
    %c0_i32_0 = arith.constant 0 : i32
    return %c0_i32, %arg0 : i32, i32
  }
}

</mosaic_0001>

<llo_original>
// kernel: _lambda_.1
$region0: #{_lambda_.1}
  #allocation0 [shape = 'u32[]', space=smem, size = 0x4, offset = 0x4, fixed_abs, tag = 'smem constant byte address 0x4 - core index']
  #allocation1 [shape = 'u32[72,128]{1,0:T(1,128)}', space=vmem, size = 0x9000, scoped, tag = 'internal scratch']
  %s0 = inlined_call_operand.vmem [shape: f32[256,16], index: 0, kind: input, shape index: {}]
  %s1 = inlined_call_operand.vmem [shape: bf16[64,16], index: 1, kind: input, shape index: {}]
  %s2 = inlined_call_operand.vmem [shape: f32[64,1], index: 2, kind: input, shape index: {}]
  %s3 = inlined_call_operand.vmem [shape: bf16[32,64], index: 3, kind: input, shape index: {}]
  %s4 = inlined_call_operand.vmem [shape: f32[32,1], index: 4, kind: input, shape index: {}]
  %s5 = inlined_call_operand.vmem [shape: bf16[32,32], index: 5, kind: input, shape index: {}]
  %s6 = inlined_call_operand.vmem [shape: f32[32,1], index: 6, kind: input, shape index: {}]
  %s7 = inlined_call_operand.vmem [shape: bf16[8,32], index: 7, kind: input, shape index: {}]
  %s8 = inlined_call_operand.vmem [shape: f32[8,1], index: 8, kind: input, shape index: {}]
  %s9 = inlined_call_operand.vmem [shape: f32[8,256], index: 9, kind: output, shape index: {}]
  %s10 = sld [smem:[#allocation0]]
  $region46: #{_lambda_.1} parent=0
    _
  %s12 = ssub.s32 1, %s10
  %s13 = scalar_select 0, %s12, %s10
  // Predicated region
  $region2: #{_lambda_.1} parent=0 // pred_check
    _
  $region3: #{_lambda_.1} parent=0 // pred_check_branch
    %15 = sbr.rel (0) target = $region5
  $region4: #{_lambda_.1} parent=0 // pred_region
    _
  $region5: #{_lambda_.1} parent=0 // pred_fallthru
    _
  // Predicated region
  $region6: #{_lambda_.1} parent=0 // pred_check
    _
  $region7: #{_lambda_.1} parent=0 // pred_check_branch
    %17 = sbr.rel (0) target = $region9
  $region8: #{_lambda_.1} parent=0 // pred_region
    _
  $region9: #{_lambda_.1} parent=0 // pred_fallthru
    _
  // Predicated region
  $region10: #{_lambda_.1} parent=0 // pred_check
    _
  $region11: #{_lambda_.1} parent=0 // pred_check_branch
    %19 = sbr.rel (0) target = $region13
  $region12: #{_lambda_.1} parent=0 // pred_region
    _
  $region13: #{_lambda_.1} parent=0 // pred_fallthru
    _
  // Predicated region
  $region14: #{_lambda_.1} parent=0 // pred_check
    _
  $region15: #{_lambda_.1} parent=0 // pred_check_branch
    %21 = sbr.rel (0) target = $region17
  $region16: #{_lambda_.1} parent=0 // pred_region
    _
  $region17: #{_lambda_.1} parent=0 // pred_fallthru
    _
  // Predicated region
  $region18: #{_lambda_.1} parent=0 // pred_check
    _
  $region19: #{_lambda_.1} parent=0 // pred_check_branch
    %23 = sbr.rel (0) target = $region21
  $region20: #{_lambda_.1} parent=0 // pred_region
    _
  $region21: #{_lambda_.1} parent=0 // pred_fallthru
    _
  // Predicated region
  $region22: #{_lambda_.1} parent=0 // pred_check
    _
  $region23: #{_lambda_.1} parent=0 // pred_check_branch
    %25 = sbr.rel (0) target = $region25
  $region24: #{_lambda_.1} parent=0 // pred_region
    _
  $region25: #{_lambda_.1} parent=0 // pred_fallthru
    _
  // Predicated region
  $region26: #{_lambda_.1} parent=0 // pred_check
    _
  $region27: #{_lambda_.1} parent=0 // pred_check_branch
    %27 = sbr.rel (0) target = $region29
  $region28: #{_lambda_.1} parent=0 // pred_region
    _
  $region29: #{_lambda_.1} parent=0 // pred_fallthru
    _
  // Predicated region
  $region30: #{_lambda_.1} parent=0 // pred_check
    _
  $region31: #{_lambda_.1} parent=0 // pred_check_branch
    %29 = sbr.rel (0) target = $region33
  $region32: #{_lambda_.1} parent=0 // pred_region
    _
  $region33: #{_lambda_.1} parent=0 // pred_fallthru
    _
  // Predicated region
  $region34: #{_lambda_.1} parent=0 // pred_check
    _
  $region35: #{_lambda_.1} parent=0 // pred_check_branch
    %31 = sbr.rel (0) target = $region37
  $region36: #{_lambda_.1} parent=0 // pred_region
    _
  $region37: #{_lambda_.1} parent=0 // pred_fallthru
    _
  %v33 = vld [vmem:[%s0] sm:$0xff]
  %v34 = vld [vmem:[%s0 + $0x8] sm:$0xff]
  %v35 = vld [vmem:[%s0 + $0x10] sm:$0xff]
  %v36 = vld [vmem:[%s0 + $0x18] sm:$0xff]
  %v37 = vld [vmem:[%s0 + $0x20] sm:$0xff]
  %v38 = vld [vmem:[%s0 + $0x28] sm:$0xff]
  %v39 = vld [vmem:[%s0 + $0x30] sm:$0xff]
  %v40 = vld [vmem:[%s0 + $0x38] sm:$0xff]
  %v41 = vld [vmem:[%s0 + $0x40] sm:$0xff]
  %v42 = vld [vmem:[%s0 + $0x48] sm:$0xff]
  %v43 = vld [vmem:[%s0 + $0x50] sm:$0xff]
  %v44 = vld [vmem:[%s0 + $0x58] sm:$0xff]
  %v45 = vld [vmem:[%s0 + $0x60] sm:$0xff]
  %v46 = vld [vmem:[%s0 + $0x68] sm:$0xff]
  %v47 = vld [vmem:[%s0 + $0x70] sm:$0xff]
  %v48 = vld [vmem:[%s0 + $0x78] sm:$0xff]
  %v49 = vld [vmem:[%s0 + $0x80] sm:$0xff]
  %v50 = vld [vmem:[%s0 + $0x88] sm:$0xff]
  %v51 = vld [vmem:[%s0 + $0x90] sm:$0xff]
  %v52 = vld [vmem:[%s0 + $0x98] sm:$0xff]
  %v53 = vld [vmem:[%s0 + $0xa0] sm:$0xff]
  %v54 = vld [vmem:[%s0 + $0xa8] sm:$0xff]
  %v55 = vld [vmem:[%s0 + $0xb0] sm:$0xff]
  %v56 = vld [vmem:[%s0 + $0xb8] sm:$0xff]
  %v57 = vld [vmem:[%s0 + $0xc0] sm:$0xff]
  %v58 = vld [vmem:[%s0 + $0xc8] sm:$0xff]
  %v59 = vld [vmem:[%s0 + $0xd0] sm:$0xff]
  %v60 = vld [vmem:[%s0 + $0xd8] sm:$0xff]
  %v61 = vld [vmem:[%s0 + $0xe0] sm:$0xff]
  %v62 = vld [vmem:[%s0 + $0xe8] sm:$0xff]
  %v63 = vld [vmem:[%s0 + $0xf0] sm:$0xff]
  %v64 = vld [vmem:[%s0 + $0xf8] sm:$0xff]
  %v65 = vpack.c.bf16 %v34, %v33
  %v66 = vpack.c.bf16 %v36, %v35
  %v67 = vpack.c.bf16 %v38, %v37
  %v68 = vpack.c.bf16 %v40, %v39
  %v69 = vpack.c.bf16 %v42, %v41
  %v70 = vpack.c.bf16 %v44, %v43
  %v71 = vpack.c.bf16 %v46, %v45
  %v72 = vpack.c.bf16 %v48, %v47
  %v73 = vpack.c.bf16 %v50, %v49
  %v74 = vpack.c.bf16 %v52, %v51
  %v75 = vpack.c.bf16 %v54, %v53
  %v76 = vpack.c.bf16 %v56, %v55
  %v77 = vpack.c.bf16 %v58, %v57
  %v78 = vpack.c.bf16 %v60, %v59
  %v79 = vpack.c.bf16 %v62, %v61
  %v80 = vpack.c.bf16 %v64, %v63
  %v81 = vld [vmem:[%s1] sm:$0xf]
  %v82 = vld [vmem:[%s1 + $0x4] sm:$0xf]
  %v83 = vld [vmem:[%s1 + $0x8] sm:$0xf]
  %v84 = vld [vmem:[%s1 + $0xc] sm:$0xf]
  %v85 = vld [vmem:[%s1 + $0x10] sm:$0xf]
  %v86 = vld [vmem:[%s1 + $0x14] sm:$0xf]
  %v87 = vld [vmem:[%s1 + $0x18] sm:$0xf]
  %v88 = vld [vmem:[%s1 + $0x1c] sm:$0xf]
  %v89 = vld [vmem:[%s2] sm:$0xff]
  %v90 = vld [vmem:[%s2 + $0x8] sm:$0xff]
  %v91 = vld [vmem:[%s2 + $0x10] sm:$0xff]
  %v92 = vld [vmem:[%s2 + $0x18] sm:$0xff]
  %v93 = vld [vmem:[%s2 + $0x20] sm:$0xff]
  %v94 = vld [vmem:[%s2 + $0x28] sm:$0xff]
  %v95 = vld [vmem:[%s2 + $0x30] sm:$0xff]
  %v96 = vld [vmem:[%s2 + $0x38] sm:$0xff]
  %98 = vset.pattern.permute.xlu0 0
  %99 = vperm.xlu0 %98, %v89
  %v100 = vpop.permute.xlu0 %99
  %103 = vset.pattern.permute.xlu0 0
  %104 = vperm.xlu0 %103, %v90
  %v105 = vpop.permute.xlu0 %104
  %108 = vset.pattern.permute.xlu0 0
  %109 = vperm.xlu0 %108, %v91
  %v110 = vpop.permute.xlu0 %109
  %113 = vset.pattern.permute.xlu0 0
  %114 = vperm.xlu0 %113, %v92
  %v115 = vpop.permute.xlu0 %114
  %118 = vset.pattern.permute.xlu0 0
  %119 = vperm.xlu0 %118, %v93
  %v120 = vpop.permute.xlu0 %119
  %123 = vset.pattern.permute.xlu0 0
  %124 = vperm.xlu0 %123, %v94
  %v125 = vpop.permute.xlu0 %124
  %128 = vset.pattern.permute.xlu0 0
  %129 = vperm.xlu0 %128, %v95
  %v130 = vpop.permute.xlu0 %129
  %133 = vset.pattern.permute.xlu0 0
  %134 = vperm.xlu0 %133, %v96
  %v135 = vpop.permute.xlu0 %134
  %v145 = vunpack.c.l.b16 %v81
  %v146 = vunpack.c.l.b16 %v82
  %v147 = vunpack.c.l.b16 %v83
  %v148 = vunpack.c.l.b16 %v84
  %v149 = vunpack.c.l.b16 %v85
  %v150 = vunpack.c.l.b16 %v86
  %v151 = vunpack.c.l.b16 %v87
  %v152 = vunpack.c.l.b16 %v88
  %v153 = vpack.c.b16 %v146, %v145
  %v154 = vpack.c.b16 %v148, %v147
  %v155 = vpack.c.b16 %v150, %v149
  %v156 = vpack.c.b16 %v152, %v151
  %vm157 = vcmask 130048
  %v159 = vsel %vm157, %v153, 0
  %v162 = vsel %vm157, %v154, 0
  %v165 = vsel %vm157, %v155, 0
  %v168 = vsel %vm157, %v156, 0
  %v171 = vsel %vm157, %v65, 0
  %v174 = vsel %vm157, %v66, 0
  %v177 = vsel %vm157, %v67, 0
  %v180 = vsel %vm157, %v68, 0
  %v183 = vsel %vm157, %v69, 0
  %v186 = vsel %vm157, %v70, 0
  %v189 = vsel %vm157, %v71, 0
  %v192 = vsel %vm157, %v72, 0
  %v195 = vsel %vm157, %v73, 0
  %v198 = vsel %vm157, %v74, 0
  %v201 = vsel %vm157, %v75, 0
  %v204 = vsel %vm157, %v76, 0
  %v207 = vsel %vm157, %v77, 0
  %v210 = vsel %vm157, %v78, 0
  %v213 = vsel %vm157, %v79, 0
  %v216 = vsel %vm157, %v80, 0
  %218 = vmatpush.bf16.xpose.msra.mxu0 %v192
  %219 = vmatpush.bf16.xpose.msra.mxu0 %v189
  %220 = vmatpush.bf16.xpose.msra.mxu0 %v186
  %221 = vmatpush.bf16.xpose.msra.mxu0 %v183
  %222 = vmatpush.bf16.xpose.msra.mxu0 %v180
  %223 = vmatpush.bf16.xpose.msra.mxu0 %v177
  %224 = vmatpush.bf16.xpose.msra.mxu0 %v174
  %225 = vmatpush.bf16.xpose.msra.mxu0 %v171
  %226 = vmatmul.bf16.gmra.mxu0 %v159
  %v227 = vpop.f32.mrf.mxu0
  %v228 = vadd.f32 %v100, %v227
  %v229 = vpop.f32.mrf.mxu0
  %v230 = vadd.f32 %v105, %v229
  %231 = vmatmul.bf16.gmra.mxu0 %v162
  %v232 = vpop.f32.mrf.mxu0
  %v233 = vadd.f32 %v110, %v232
  %v234 = vpop.f32.mrf.mxu0
  %v235 = vadd.f32 %v115, %v234
  %236 = vmatmul.bf16.gmra.mxu0 %v165
  %v237 = vpop.f32.mrf.mxu0
  %v238 = vadd.f32 %v120, %v237
  %v239 = vpop.f32.mrf.mxu0
  %v240 = vadd.f32 %v125, %v239
  %241 = vmatmul.bf16.gmra.mxu0 %v168
  %v242 = vpop.f32.mrf.mxu0
  %v243 = vadd.f32 %v130, %v242
  %v244 = vpop.f32.mrf.mxu0
  %v245 = vadd.f32 %v135, %v244
  %246 = vdwg.mxu0
  %247 = vmatpush.bf16.xpose.msra.mxu0 %v216
  %248 = vmatpush.bf16.xpose.msra.mxu0 %v213
  %249 = vmatpush.bf16.xpose.msra.mxu0 %v210
  %250 = vmatpush.bf16.xpose.msra.mxu0 %v207
  %251 = vmatpush.bf16.xpose.msra.mxu0 %v204
  %252 = vmatpush.bf16.xpose.msra.mxu0 %v201
  %253 = vmatpush.bf16.xpose.msra.mxu0 %v198
  %254 = vmatpush.bf16.xpose.msra.mxu0 %v195
  %255 = vmatmul.bf16.gmra.mxu0 %v159
  %v256 = vpop.f32.mrf.mxu0
  %v257 = vadd.f32 %v100, %v256
  %v258 = vpop.f32.mrf.mxu0
  %v259 = vadd.f32 %v105, %v258
  %260 = vmatmul.bf16.gmra.mxu0 %v162
  %v261 = vpop.f32.mrf.mxu0
  %v262 = vadd.f32 %v110, %v261
  %v263 = vpop.f32.mrf.mxu0
  %v264 = vadd.f32 %v115, %v263
  %265 = vmatmul.bf16.gmra.mxu0 %v165
  %v266 = vpop.f32.mrf.mxu0
  %v267 = vadd.f32 %v120, %v266
  %v268 = vpop.f32.mrf.mxu0
  %v269 = vadd.f32 %v125, %v268
  %270 = vmatmul.bf16.gmra.mxu0 %v168
  %v271 = vpop.f32.mrf.mxu0
  %v272 = vadd.f32 %v130, %v271
  %v273 = vpop.f32.mrf.mxu0
  %v274 = vadd.f32 %v135, %v273
  %275 = vdwg.mxu0
  %v276 = vmax.f32 %v228, 0.0
  %v277 = vmax.f32 %v257, 0.0
  %v278 = vmax.f32 %v230, 0.0
  %v279 = vmax.f32 %v259, 0.0
  %v280 = vmax.f32 %v233, 0.0
  %v281 = vmax.f32 %v262, 0.0
  %v282 = vmax.f32 %v235, 0.0
  %v283 = vmax.f32 %v264, 0.0
  %v284 = vmax.f32 %v238, 0.0
  %v285 = vmax.f32 %v267, 0.0
  %v286 = vmax.f32 %v240, 0.0
  %v287 = vmax.f32 %v269, 0.0
  %v288 = vmax.f32 %v243, 0.0
  %v289 = vmax.f32 %v272, 0.0
  %v290 = vmax.f32 %v245, 0.0
  %v291 = vmax.f32 %v274, 0.0
  %v292 = vld [vmem:[%s3] sm:$0xf]
  %v293 = vld [vmem:[%s3 + $0x4] sm:$0xf]
  %v294 = vld [vmem:[%s3 + $0x8] sm:$0xf]
  %v295 = vld [vmem:[%s3 + $0xc] sm:$0xf]
  %v296 = vpack.c.bf16 %v278, %v276
  %v297 = vpack.c.bf16 %v279, %v277
  %v298 = vpack.c.bf16 %v282, %v280
  %v299 = vpack.c.bf16 %v283, %v281
  %v300 = vpack.c.bf16 %v286, %v284
  %v301 = vpack.c.bf16 %v287, %v285
  %v302 = vpack.c.bf16 %v290, %v288
  %v303 = vpack.c.bf16 %v291, %v289
  %v304 = vld [vmem:[%s4] sm:$0xff]
  %v305 = vld [vmem:[%s4 + $0x8] sm:$0xff]
  %v306 = vld [vmem:[%s4 + $0x10] sm:$0xff]
  %v307 = vld [vmem:[%s4 + $0x18] sm:$0xff]
  %309 = vset.pattern.permute.xlu0 0
  %310 = vperm.xlu0 %309, %v304
  %v311 = vpop.permute.xlu0 %310
  %314 = vset.pattern.permute.xlu0 0
  %315 = vperm.xlu0 %314, %v305
  %v316 = vpop.permute.xlu0 %315
  %319 = vset.pattern.permute.xlu0 0
  %320 = vperm.xlu0 %319, %v306
  %v321 = vpop.permute.xlu0 %320
  %324 = vset.pattern.permute.xlu0 0
  %325 = vperm.xlu0 %324, %v307
  %v326 = vpop.permute.xlu0 %325
  %v332 = vunpack.c.l.b16 %v292
  %v333 = vunpack.c.l.b16 %v293
  %v334 = vunpack.c.l.b16 %v294
  %v335 = vunpack.c.l.b16 %v295
  %v336 = vpack.c.b16 %v333, %v332
  %v337 = vpack.c.b16 %v335, %v334
  %vm338 = vcmask 523264
  %v340 = vsel %vm338, %v336, 0
  %v343 = vsel %vm338, %v337, 0
  %345 = vmatpush.bf16.msra.mxu0 0
  %346 = vmatpush.bf16.msra.mxu0 0
  %347 = vmatpush.bf16.msra.mxu0 0
  %348 = vmatpush.bf16.msra.mxu0 0
  %349 = vmatpush.bf16.msra.mxu0 %v302
  %350 = vmatpush.bf16.msra.mxu0 %v300
  %351 = vmatpush.bf16.msra.mxu0 %v298
  %352 = vmatpush.bf16.msra.mxu0 %v296
  %353 = vmatmul.bf16.gmra.mxu0 %v340
  %v354 = vpop.f32.mrf.mxu0
  %v355 = vadd.f32 %v311, %v354
  %v356 = vpop.f32.mrf.mxu0
  %v357 = vadd.f32 %v316, %v356
  %358 = vmatmul.bf16.gmra.mxu0 %v343
  %v359 = vpop.f32.mrf.mxu0
  %v360 = vadd.f32 %v321, %v359
  %v361 = vpop.f32.mrf.mxu0
  %v362 = vadd.f32 %v326, %v361
  %363 = vdwg.mxu0
  %364 = vmatpush.bf16.msra.mxu0 0
  %365 = vmatpush.bf16.msra.mxu0 0
  %366 = vmatpush.bf16.msra.mxu0 0
  %367 = vmatpush.bf16.msra.mxu0 0
  %368 = vmatpush.bf16.msra.mxu0 %v303
  %369 = vmatpush.bf16.msra.mxu0 %v301
  %370 = vmatpush.bf16.msra.mxu0 %v299
  %371 = vmatpush.bf16.msra.mxu0 %v297
  %372 = vmatmul.bf16.gmra.mxu0 %v340
  %v373 = vpop.f32.mrf.mxu0
  %v374 = vadd.f32 %v311, %v373
  %v375 = vpop.f32.mrf.mxu0
  %v376 = vadd.f32 %v316, %v375
  %377 = vmatmul.bf16.gmra.mxu0 %v343
  %v378 = vpop.f32.mrf.mxu0
  %v379 = vadd.f32 %v321, %v378
  %v380 = vpop.f32.mrf.mxu0
  %v381 = vadd.f32 %v326, %v380
  %382 = vdwg.mxu0
  %v383 = vmax.f32 %v355, 0.0
  %v384 = vmax.f32 %v374, 0.0
  %v385 = vmax.f32 %v357, 0.0
  %v386 = vmax.f32 %v376, 0.0
  %v387 = vmax.f32 %v360, 0.0
  %v388 = vmax.f32 %v379, 0.0
  %v389 = vmax.f32 %v362, 0.0
  %v390 = vmax.f32 %v381, 0.0
  %v391 = vld [vmem:[%s5] sm:$0xf]
  %v392 = vld [vmem:[%s5 + $0x4] sm:$0xf]
  %v393 = vld [vmem:[%s5 + $0x8] sm:$0xf]
  %v394 = vld [vmem:[%s5 + $0xc] sm:$0xf]
  %v395 = vpack.c.bf16 %v385, %v383
  %v396 = vpack.c.bf16 %v386, %v384
  %v397 = vpack.c.bf16 %v389, %v387
  %v398 = vpack.c.bf16 %v390, %v388
  %v399 = vld [vmem:[%s6] sm:$0xff]
  %v400 = vld [vmem:[%s6 + $0x8] sm:$0xff]
  %v401 = vld [vmem:[%s6 + $0x10] sm:$0xff]
  %v402 = vld [vmem:[%s6 + $0x18] sm:$0xff]
  %404 = vset.pattern.permute.xlu0 0
  %405 = vperm.xlu0 %404, %v399
  %v406 = vpop.permute.xlu0 %405
  %409 = vset.pattern.permute.xlu0 0
  %410 = vperm.xlu0 %409, %v400
  %v411 = vpop.permute.xlu0 %410
  %414 = vset.pattern.permute.xlu0 0
  %415 = vperm.xlu0 %414, %v401
  %v416 = vpop.permute.xlu0 %415
  %419 = vset.pattern.permute.xlu0 0
  %420 = vperm.xlu0 %419, %v402
  %v421 = vpop.permute.xlu0 %420
  %v427 = vunpack.c.l.b16 %v391
  %v428 = vunpack.c.l.b16 %v392
  %v429 = vunpack.c.l.b16 %v393
  %v430 = vunpack.c.l.b16 %v394
  %v431 = vpack.c.b16 %v428, %v427
  %v432 = vpack.c.b16 %v430, %v429
  %vm433 = vcmask 261120
  %v435 = vsel %vm433, %v431, 0
  %v438 = vsel %vm433, %v432, 0
  %440 = vmatpush.bf16.msra.mxu0 0
  %441 = vmatpush.bf16.msra.mxu0 0
  %442 = vmatpush.bf16.msra.mxu0 0
  %443 = vmatpush.bf16.msra.mxu0 0
  %444 = vmatpush.bf16.msra.mxu0 0
  %445 = vmatpush.bf16.msra.mxu0 0
  %446 = vmatpush.bf16.msra.mxu0 %v397
  %447 = vmatpush.bf16.msra.mxu0 %v395
  %448 = vmatmul.bf16.gmra.mxu0 %v435
  %v449 = vpop.f32.mrf.mxu0
  %v450 = vadd.f32 %v406, %v449
  %v451 = vpop.f32.mrf.mxu0
  %v452 = vadd.f32 %v411, %v451
  %453 = vmatmul.bf16.gmra.mxu0 %v438
  %v454 = vpop.f32.mrf.mxu0
  %v455 = vadd.f32 %v416, %v454
  %v456 = vpop.f32.mrf.mxu0
  %v457 = vadd.f32 %v421, %v456
  %458 = vdwg.mxu0
  %459 = vmatpush.bf16.msra.mxu0 0
  %460 = vmatpush.bf16.msra.mxu0 0
  %461 = vmatpush.bf16.msra.mxu0 0
  %462 = vmatpush.bf16.msra.mxu0 0
  %463 = vmatpush.bf16.msra.mxu0 0
  %464 = vmatpush.bf16.msra.mxu0 0
  %465 = vmatpush.bf16.msra.mxu0 %v398
  %466 = vmatpush.bf16.msra.mxu0 %v396
  %467 = vmatmul.bf16.gmra.mxu0 %v435
  %v468 = vpop.f32.mrf.mxu0
  %v469 = vadd.f32 %v406, %v468
  %v470 = vpop.f32.mrf.mxu0
  %v471 = vadd.f32 %v411, %v470
  %472 = vmatmul.bf16.gmra.mxu0 %v438
  %v473 = vpop.f32.mrf.mxu0
  %v474 = vadd.f32 %v416, %v473
  %v475 = vpop.f32.mrf.mxu0
  %v476 = vadd.f32 %v421, %v475
  %477 = vdwg.mxu0
  %v478 = vmax.f32 %v450, 0.0
  %v479 = vmax.f32 %v469, 0.0
  %v480 = vmax.f32 %v452, 0.0
  %v481 = vmax.f32 %v471, 0.0
  %v482 = vmax.f32 %v455, 0.0
  %v483 = vmax.f32 %v474, 0.0
  %v484 = vmax.f32 %v457, 0.0
  %v485 = vmax.f32 %v476, 0.0
  %v486 = vld [vmem:[%s7] sm:$0xf]
  %v487 = vpack.c.bf16 %v480, %v478
  %v488 = vpack.c.bf16 %v481, %v479
  %v489 = vpack.c.bf16 %v484, %v482
  %v490 = vpack.c.bf16 %v485, %v483
  %v491 = vld [vmem:[%s8] sm:$0xff]
  %493 = vset.pattern.permute.xlu0 0
  %494 = vperm.xlu0 %493, %v491
  %v495 = vpop.permute.xlu0 %494
  %v498 = vsel %vm433, %v486, 0
  %500 = vmatpush.bf16.msra.mxu0 0
  %501 = vmatpush.bf16.msra.mxu0 0
  %502 = vmatpush.bf16.msra.mxu0 0
  %503 = vmatpush.bf16.msra.mxu0 0
  %504 = vmatpush.bf16.msra.mxu0 0
  %505 = vmatpush.bf16.msra.mxu0 0
  %506 = vmatpush.bf16.msra.mxu0 %v489
  %507 = vmatpush.bf16.msra.mxu0 %v487
  %508 = vmatmul.bf16.gmra.mxu0 %v498
  %v509 = vpop.f32.mrf.mxu0
  %v510 = vadd.f32 %v495, %v509
  %v511 = vpop.f32.mrf.mxu0
  %512 = vdwg.mxu0
  %513 = vmatpush.bf16.msra.mxu0 0
  %514 = vmatpush.bf16.msra.mxu0 0
  %515 = vmatpush.bf16.msra.mxu0 0
  %516 = vmatpush.bf16.msra.mxu0 0
  %517 = vmatpush.bf16.msra.mxu0 0
  %518 = vmatpush.bf16.msra.mxu0 0
  %519 = vmatpush.bf16.msra.mxu0 %v490
  %520 = vmatpush.bf16.msra.mxu0 %v488
  %521 = vmatmul.bf16.gmra.mxu0 %v498
  %v522 = vpop.f32.mrf.mxu0
  %v523 = vadd.f32 %v495, %v522
  %v524 = vpop.f32.mrf.mxu0
  %525 = vdwg.mxu0
  %526 = vst [vmem:[%s9] sm:$0xff] %v510
  %527 = vst [vmem:[%s9 + $0x8] sm:$0xff] %v523
  // Predicated region
  $region38: #{_lambda_.1} parent=0 // pred_check
    _
  $region39: #{_lambda_.1} parent=0 // pred_check_branch
    %529 = sbr.rel (0) target = $region41
  $region40: #{_lambda_.1} parent=0 // pred_region
    _
  $region41: #{_lambda_.1} parent=0 // pred_fallthru
    _
  // Predicated region
  $region42: #{_lambda_.1} parent=0 // pred_check
    _
  $region43: #{_lambda_.1} parent=0 // pred_check_branch
    %531 = sbr.rel (0) target = $region45
  $region44: #{_lambda_.1} parent=0 // pred_region
    _
  $region45: #{_lambda_.1} parent=0 // pred_fallthru
    _

</llo_original>
